<compile_context>
chip_gen: v5e
topology: v5e:2x2
jax: 0.10.0
libtpu: 0.0.40
codegen_flags: <defaults>
</compile_context>

<pallas_src>
import jax
import jax.numpy as jnp
from jax.experimental import pallas as pl
from jax.experimental.pallas import tpu as pltpu

LN_EPS = 1e-5  # nn.LayerNorm default


def embedding_kernel(x_smem,                      # scalar-prefetch: token ids [N] (SMEM, flat)
                     seg_ref,                     # [TS, 1] int32 segment ids (VMEM)
                     pos_ref,                     # [TS, D] position-embedding slice (VMEM)
                     segw_ref,                    # [NSEG, D] segment table (VMEM, resident)
                     gamma_ref, beta_ref,         # [1, D] LayerNorm params (VMEM)
                     tokw_hbm,                    # [V, D] token table (HBM, manual DMA)
                     out_ref,                     # [TS, D] output tile
                     tokbuf,                      # VMEM scratch [TS, D] gather staging
                     dma_sem):                    # DMA semaphore
    TS, D = tokbuf.shape
    NSEG = segw_ref.shape[0]
    nst = pl.num_programs(1)
    # first flattened row of this tile (ids array is row-major [B*S], same order as output)
    row0 = (pl.program_id(0) * nst + pl.program_id(1)) * TS

    # --- 1) token embedding: per-row DMA gather from the HBM table --------------------
    # ids come from SMEM (scalar unit drives the DMA addressing; no vector-slot cost).
    @pl.loop(0, TS)
    def _start(r):
        tid = x_smem[row0 + r]
        pltpu.make_async_copy(tokw_hbm.at[pl.ds(tid, 1)],
                              tokbuf.at[pl.ds(r, 1)],
                              dma_sem).start()

    # --- 2) position + segment embedding on the VPU while the row DMAs are in flight --
    seg_ids = seg_ref[...]                               # (TS, 1) int32
    rest = pos_ref[...]                                  # (TS, D) f32
    for k in range(NSEG):                                # static, NSEG is tiny (2)
        rest = rest + jnp.where(seg_ids == k, segw_ref[k:k + 1, :], 0.0)

    # --- 3) wait for all row DMAs ------------------------------------------------------
    @pl.loop(0, TS)
    def _wait(r):
        pltpu.make_async_copy(tokw_hbm.at[pl.ds(0, 1)],
                              tokbuf.at[pl.ds(r, 1)],
                              dma_sem).wait()

    # --- 4) sum + fused LayerNorm over D (one-pass variance, rsqrt on the EUP) --------
    emb = tokbuf[...] + rest                             # (TS, D) f32
    mean = jnp.mean(emb, axis=-1, keepdims=True)
    msq = jnp.mean(emb * emb, axis=-1, keepdims=True)
    var = msq - mean * mean
    inv = jax.lax.rsqrt(var + LN_EPS)
    out_ref[...] = (((emb - mean) * inv) * gamma_ref[...]
                    + beta_ref[...]).astype(out_ref.dtype)


def _pick_tile(S, max_tile):
    # largest divisor of S that is <= max_tile, preferring multiples of 8
    divs = [d for d in range(1, min(S, max_tile) + 1) if S % d == 0]
    mult8 = [d for d in divs if d % 8 == 0]
    return max(mult8) if mult8 else max(divs)


def bert_embedding(x, seg, tok_w, pos_w, seg_w, gamma, beta, *, max_tile=256):
    B, S = x.shape
    V, D = tok_w.shape
    NSEG = seg_w.shape[0]
    N = B * S

    # sequence tile: keeps positions contiguous per tile so pos_w is a plain BlockSpec
    # slice and bounds the per-step VMEM working set.
    TS = _pick_tile(S, max_tile)
    nst = S // TS

    ids = x.reshape(N).astype(jnp.int32)                 # 1-D SMEM (minimal padding)
    seg2 = seg.reshape(N, 1).astype(jnp.int32)
    gamma2 = gamma.reshape(1, D)
    beta2 = beta.reshape(1, D)

    grid_spec = pltpu.PrefetchScalarGridSpec(
        num_scalar_prefetch=1,                       # token ids -> SMEM
        grid=(B, nst),
        in_specs=[
            # segment ids, flattened row-major to match the [N, D] output
            pl.BlockSpec((TS, 1), lambda b, s, xids: (b * nst + s, 0)),
            # position embeddings: contiguous slice for this sequence tile
            pl.BlockSpec((TS, D), lambda b, s, xids: (s, 0)),
            # tiny segment table, fully resident
            pl.BlockSpec((NSEG, D), lambda b, s, xids: (0, 0)),
            # LayerNorm params, fully resident
            pl.BlockSpec((1, D), lambda b, s, xids: (0, 0)),
            pl.BlockSpec((1, D), lambda b, s, xids: (0, 0)),
            # token table stays in HBM; gathered row-by-row with manual DMA
            pl.BlockSpec(memory_space=pl.ANY),
        ],
        out_specs=pl.BlockSpec((TS, D), lambda b, s, xids: (b * nst + s, 0)),
        scratch_shapes=[
            pltpu.VMEM((TS, D), tok_w.dtype),        # token-row gather staging
            pltpu.SemaphoreType.DMA(()),
        ],
    )

    out = pl.pallas_call(
        embedding_kernel,
        out_shape=jax.ShapeDtypeStruct((N, D), jnp.float32),
        grid_spec=grid_spec,
        compiler_params=pltpu.CompilerParams(
            dimension_semantics=("parallel", "parallel")),
    )(ids, seg2, pos_w, seg_w, gamma2, beta2, tok_w)

    return out.reshape(B, S, D)


def reference(x, seg, tok_w, pos_w, seg_w, gamma, beta):
    B, S = x.shape
    pos = jnp.broadcast_to(jnp.arange(S, dtype=jnp.int32)[None, :], (B, S))
    emb = (jnp.take(tok_w, x, axis=0)
           + jnp.take(pos_w, pos, axis=0)
           + jnp.take(seg_w, seg, axis=0))
    mean = jnp.mean(emb, axis=-1, keepdims=True)
    var = jnp.mean((emb - mean) ** 2, axis=-1, keepdims=True)
    return (emb - mean) * jax.lax.rsqrt(var + LN_EPS) * gamma + beta


if __name__ == "__main__":
    # config (small, synthetic)
    vocab_size, maxlen, n_segments, d_model = 32, 16, 2, 32
    batch, seq_len = 2, 8

    key = jax.random.PRNGKey(0)
    k_tok, k_pos, k_seg, k_g, k_b, k_x, k_s = jax.random.split(key, 7)

    tok_w = jax.random.normal(k_tok, (vocab_size, d_model), jnp.float32)
    pos_w = jax.random.normal(k_pos, (maxlen, d_model), jnp.float32)
    seg_w = jax.random.normal(k_seg, (n_segments, d_model), jnp.float32)
    gamma = jnp.ones((d_model,), jnp.float32) + 0.1 * jax.random.normal(k_g, (d_model,), jnp.float32)
    beta = 0.1 * jax.random.normal(k_b, (d_model,), jnp.float32)

    x = jax.random.randint(k_x, (batch, seq_len), 0, vocab_size, dtype=jnp.int32)
    seg = jax.random.randint(k_s, (batch, seq_len), 0, n_segments, dtype=jnp.int32)

    out = bert_embedding(x, seg, tok_w, pos_w, seg_w, gamma, beta)
    out = jax.block_until_ready(out)

    ref = reference(x, seg, tok_w, pos_w, seg_w, gamma, beta)
    assert out.shape == (batch, seq_len, d_model)
    assert jnp.allclose(out, ref, atol=1e-4, rtol=1e-4)

    print("KERNEL_OK")
</pallas_src>

<mosaic_0001>
module attributes {stable_mosaic.version = 11 : i64} {
  func.func @embedding_kernel(%arg0: i32, %arg1: i32, %arg2: memref<16xi32, #tpu.memory_space<smem>>, %arg3: memref<8x1xi32, #tpu.memory_space<vmem>>, %arg4: memref<8x32xf32, #tpu.memory_space<vmem>>, %arg5: memref<2x32xf32, #tpu.memory_space<vmem>>, %arg6: memref<1x32xf32, #tpu.memory_space<vmem>>, %arg7: memref<1x32xf32, #tpu.memory_space<vmem>>, %arg8: memref<32x32xf32, #tpu.memory_space<any>>, %arg9: memref<8x32xf32, #tpu.memory_space<vmem>>, %arg10: memref<8x32xf32, #tpu.memory_space<vmem>>, %arg11: memref<!tpu.dma_semaphore, #tpu.memory_space<semaphore_mem>>) attributes {dimension_semantics = [#tpu.dimension_semantics<parallel>, #tpu.dimension_semantics<parallel>], iteration_bounds = array<i64: 2, 1>, scalar_prefetch = 1 : i64, scratch_operands = 2 : i64, tpu.core_type = #tpu.core_type<tc>, window_params = [{transform_indices = @transform_0, window_bounds = array<i64: 8, 1>}, {transform_indices = @transform_1, window_bounds = array<i64: 8, 32>}, {pipeline_mode = #tpu.pipeline_mode<synchronous>, transform_indices = @transform_2, window_bounds = array<i64: 2, 32>}, {pipeline_mode = #tpu.pipeline_mode<synchronous>, transform_indices = @transform_3, window_bounds = array<i64: 1, 32>}, {pipeline_mode = #tpu.pipeline_mode<synchronous>, transform_indices = @transform_4, window_bounds = array<i64: 1, 32>}, {}, {transform_indices = @transform_6, window_bounds = array<i64: 8, 32>}]} {
    %c1_i32 = arith.constant 1 : i32
    %0 = arith.muli %arg0, %c1_i32 : i32
    %1 = arith.addi %0, %arg1 : i32
    %c8_i32 = arith.constant 8 : i32
    %2 = arith.muli %1, %c8_i32 : i32
    %c0_i32 = arith.constant 0 : i32
    %c8_i32_0 = arith.constant 8 : i32
    %3 = arith.addi %c0_i32, %c8_i32_0 : i32
    %c1_i32_1 = arith.constant 1 : i32
    scf.for %arg12 = %c0_i32 to %3 step %c1_i32_1  : i32 {
      %c1_i32_29 = arith.constant 1 : i32
      %54 = arith.muli %arg12, %c1_i32_29 : i32
      %c0_i32_30 = arith.constant 0 : i32
      %55 = arith.addi %c0_i32_30, %54 : i32
      %56 = arith.addi %2, %55 : i32
      %57 = arith.index_cast %56 : i32 to index
      %58 = memref.load %arg2[%57] : memref<16xi32, #tpu.memory_space<smem>>
      %c0_i32_31 = arith.constant 0 : i32
      %59 = tpu.memref_slice %arg8[%58, %c0_i32_31] : memref<32x32xf32, #tpu.memory_space<any>> -> memref<1x32xf32, #tpu.memory_space<any>>
      %c0_i32_32 = arith.constant 0 : i32
      %60 = tpu.memref_slice %arg10[%55, %c0_i32_32] : memref<8x32xf32, #tpu.memory_space<vmem>> -> memref<1x32xf32, #tpu.memory_space<vmem>>
      tpu.enqueue_dma source(%59 : memref<1x32xf32, #tpu.memory_space<any>>) target(%60 : memref<1x32xf32, #tpu.memory_space<vmem>>) target_semaphore(%arg11 : memref<!tpu.dma_semaphore, #tpu.memory_space<semaphore_mem>>)
    }
    %c8_i32_2 = arith.constant 8 : i32
    %c0 = arith.constant 0 : index
    %c0_3 = arith.constant 0 : index
    %4 = vector.load %arg3[%c0, %c0_3] : memref<8x1xi32, #tpu.memory_space<vmem>>, vector<8x1xi32>
    %c0_4 = arith.constant 0 : index
    %c0_5 = arith.constant 0 : index
    %5 = vector.load %arg4[%c0_4, %c0_5] : memref<8x32xf32, #tpu.memory_space<vmem>>, vector<8x32xf32>
    %c0_i32_6 = arith.constant 0 : i32
    %6 = vector.broadcast %c0_i32_6 : i32 to vector<8x1xi32>
    %7 = arith.cmpi eq, %4, %6 : vector<8x1xi32>
    %c0_7 = arith.constant 0 : index
    %c0_8 = arith.constant 0 : index
    %8 = vector.load %arg5[%c0_7, %c0_8] : memref<2x32xf32, #tpu.memory_space<vmem>>, vector<1x32xf32>
    %cst = arith.constant 0.000000e+00 : f32
    %9 = vector.shape_cast %7 : vector<8x1xi1> to vector<8x1xi1>
    %10 = vector.broadcast %9 : vector<8x1xi1> to vector<8x32xi1>
    %11 = vector.shape_cast %8 : vector<1x32xf32> to vector<1x32xf32>
    %12 = vector.broadcast %11 : vector<1x32xf32> to vector<8x32xf32>
    %13 = vector.broadcast %cst : f32 to vector<8x32xf32>
    %14 = arith.select %10, %12, %13 : vector<8x32xi1>, vector<8x32xf32>
    %15 = arith.addf %5, %14 : vector<8x32xf32>
    %c1_i32_9 = arith.constant 1 : i32
    %16 = vector.broadcast %c1_i32_9 : i32 to vector<8x1xi32>
    %17 = arith.cmpi eq, %4, %16 : vector<8x1xi32>
    %c1 = arith.constant 1 : index
    %c0_10 = arith.constant 0 : index
    %18 = vector.load %arg5[%c1, %c0_10] : memref<2x32xf32, #tpu.memory_space<vmem>>, vector<1x32xf32>
    %cst_11 = arith.constant 0.000000e+00 : f32
    %19 = vector.shape_cast %17 : vector<8x1xi1> to vector<8x1xi1>
    %20 = vector.broadcast %19 : vector<8x1xi1> to vector<8x32xi1>
    %21 = vector.shape_cast %18 : vector<1x32xf32> to vector<1x32xf32>
    %22 = vector.broadcast %21 : vector<1x32xf32> to vector<8x32xf32>
    %23 = vector.broadcast %cst_11 : f32 to vector<8x32xf32>
    %24 = arith.select %20, %22, %23 : vector<8x32xi1>, vector<8x32xf32>
    %25 = arith.addf %15, %24 : vector<8x32xf32>
    %c0_i32_12 = arith.constant 0 : i32
    %c8_i32_13 = arith.constant 8 : i32
    %26 = arith.addi %c0_i32_12, %c8_i32_13 : i32
    %c1_i32_14 = arith.constant 1 : i32
    scf.for %arg12 = %c0_i32_12 to %26 step %c1_i32_14  : i32 {
      %c1_i32_29 = arith.constant 1 : i32
      %54 = arith.muli %arg12, %c1_i32_29 : i32
      %c0_i32_30 = arith.constant 0 : i32
      %55 = arith.addi %c0_i32_30, %54 : i32
      %c0_i32_31 = arith.constant 0 : i32
      %c0_i32_32 = arith.constant 0 : i32
      %56 = tpu.memref_slice %arg8[%c0_i32_31, %c0_i32_32] : memref<32x32xf32, #tpu.memory_space<any>> -> memref<1x32xf32, #tpu.memory_space<any>>
      %c0_i32_33 = arith.constant 0 : i32
      %57 = tpu.memref_slice %arg10[%55, %c0_i32_33] : memref<8x32xf32, #tpu.memory_space<vmem>> -> memref<1x32xf32, #tpu.memory_space<vmem>>
      tpu.wait_dma2 semaphore(%arg11 : memref<!tpu.dma_semaphore, #tpu.memory_space<semaphore_mem>>) src(%56 : memref<1x32xf32, #tpu.memory_space<any>>) dst(%57 : memref<1x32xf32, #tpu.memory_space<vmem>>)
    }
    %c8_i32_15 = arith.constant 8 : i32
    %c0_16 = arith.constant 0 : index
    %c0_17 = arith.constant 0 : index
    %27 = vector.load %arg10[%c0_16, %c0_17] : memref<8x32xf32, #tpu.memory_space<vmem>>, vector<8x32xf32>
    %28 = arith.addf %27, %25 : vector<8x32xf32>
    %cst_18 = arith.constant dense<0.000000e+00> : vector<8xf32>
    %29 = vector.multi_reduction <add>, %28, %cst_18 [1] : vector<8x32xf32> to vector<8xf32>
    %30 = vector.shape_cast %29 : vector<8xf32> to vector<8x1xf32>
    %cst_19 = arith.constant 3.200000e+01 : f32
    %31 = vector.broadcast %cst_19 : f32 to vector<8x1xf32>
    %32 = arith.divf %30, %31 : vector<8x1xf32>
    %33 = arith.mulf %28, %28 : vector<8x32xf32>
    %cst_20 = arith.constant dense<0.000000e+00> : vector<8xf32>
    %34 = vector.multi_reduction <add>, %33, %cst_20 [1] : vector<8x32xf32> to vector<8xf32>
    %35 = vector.shape_cast %34 : vector<8xf32> to vector<8x1xf32>
    %cst_21 = arith.constant 3.200000e+01 : f32
    %36 = vector.broadcast %cst_21 : f32 to vector<8x1xf32>
    %37 = arith.divf %35, %36 : vector<8x1xf32>
    %38 = arith.mulf %32, %32 : vector<8x1xf32>
    %39 = arith.subf %37, %38 : vector<8x1xf32>
    %cst_22 = arith.constant 9.99999974E-6 : f32
    %40 = vector.broadcast %cst_22 : f32 to vector<8x1xf32>
    %41 = arith.addf %39, %40 : vector<8x1xf32>
    %42 = math.rsqrt %41 : vector<8x1xf32>
    %43 = vector.broadcast %32 : vector<8x1xf32> to vector<8x32xf32>
    %44 = arith.subf %28, %43 : vector<8x32xf32>
    %45 = vector.broadcast %42 : vector<8x1xf32> to vector<8x32xf32>
    %46 = arith.mulf %44, %45 : vector<8x32xf32>
    %c0_23 = arith.constant 0 : index
    %c0_24 = arith.constant 0 : index
    %47 = vector.load %arg6[%c0_23, %c0_24] : memref<1x32xf32, #tpu.memory_space<vmem>>, vector<1x32xf32>
    %48 = vector.broadcast %47 : vector<1x32xf32> to vector<8x32xf32>
    %49 = arith.mulf %46, %48 : vector<8x32xf32>
    %c0_25 = arith.constant 0 : index
    %c0_26 = arith.constant 0 : index
    %50 = vector.load %arg7[%c0_25, %c0_26] : memref<1x32xf32, #tpu.memory_space<vmem>>, vector<1x32xf32>
    %51 = vector.broadcast %50 : vector<1x32xf32> to vector<8x32xf32>
    %52 = arith.addf %49, %51 : vector<8x32xf32>
    %c0_27 = arith.constant 0 : index
    %c0_28 = arith.constant 0 : index
    %53 = vector.load %arg9[%c0_27, %c0_28] : memref<8x32xf32, #tpu.memory_space<vmem>>, vector<8x32xf32>
    tpu.vector_store %arg9[%c0_27, %c0_28], %52 {strides = array<i32>} : memref<8x32xf32, #tpu.memory_space<vmem>>, vector<8x32xf32>,
    return
  }
  func.func @transform_0(%arg0: i32, %arg1: i32, %arg2: memref<16xi32, #tpu.memory_space<smem>>) -> (i32, i32) {
    %c1_i32 = arith.constant 1 : i32
    %0 = arith.muli %arg0, %c1_i32 : i32
    %1 = arith.addi %0, %arg1 : i32
    %c0_i32 = arith.constant 0 : i32
    %c0_i32_0 = arith.constant 0 : i32
    return %1, %c0_i32 : i32, i32
  }
  func.func @transform_1(%arg0: i32, %arg1: i32, %arg2: memref<16xi32, #tpu.memory_space<smem>>) -> (i32, i32) {
    %c0_i32 = arith.constant 0 : i32
    %c0_i32_0 = arith.constant 0 : i32
    return %arg1, %c0_i32 : i32, i32
  }
  func.func @transform_2(%arg0: i32, %arg1: i32, %arg2: memref<16xi32, #tpu.memory_space<smem>>) -> (i32, i32) {
    %c0_i32 = arith.constant 0 : i32
    %c0_i32_0 = arith.constant 0 : i32
    %c0_i32_1 = arith.constant 0 : i32
    return %c0_i32, %c0_i32_0 : i32, i32
  }
  func.func @transform_3(%arg0: i32, %arg1: i32, %arg2: memref<16xi32, #tpu.memory_space<smem>>) -> (i32, i32) {
    %c0_i32 = arith.constant 0 : i32
    %c0_i32_0 = arith.constant 0 : i32
    %c0_i32_1 = arith.constant 0 : i32
    return %c0_i32, %c0_i32_0 : i32, i32
  }
  func.func @transform_4(%arg0: i32, %arg1: i32, %arg2: memref<16xi32, #tpu.memory_space<smem>>) -> (i32, i32) {
    %c0_i32 = arith.constant 0 : i32
    %c0_i32_0 = arith.constant 0 : i32
    %c0_i32_1 = arith.constant 0 : i32
    return %c0_i32, %c0_i32_0 : i32, i32
  }
  func.func @transform_6(%arg0: i32, %arg1: i32, %arg2: memref<16xi32, #tpu.memory_space<smem>>) -> (i32, i32) {
    %c1_i32 = arith.constant 1 : i32
    %0 = arith.muli %arg0, %c1_i32 : i32
    %1 = arith.addi %0, %arg1 : i32
    %c0_i32 = arith.constant 0 : i32
    %c0_i32_0 = arith.constant 0 : i32
    return %1, %c0_i32 : i32, i32
  }
}

</mosaic_0001>

<llo_original>
// kernel: tpu_custom_call.1
$region0: #{tpu_custom_call.1}
  #allocation0 [shape = 'u32[]', space=smem, size = 0x4, offset = 0x4, fixed_abs, tag = 'smem constant byte address 0x4 - core index']
  #allocation1 [shape = 'u32[72,128]{1,0:T(1,128)}', space=vmem, size = 0x9000, scoped, tag = 'internal scratch']
  #allocation2 [shape = 'f32[8,32]{1,0:T(8,128)}', space=vmem, size = 0x1000, scoped, tag = 'scratch operand']
  #allocation3 [shape = 's32[1]{0}', space=sflag, size = 0x4, scoped, tag = 'scratch operand']
  #allocation4 [shape = 's32[1]{0}', space=sflag, size = 0x4, scoped, tag = 'scoped memory for tpu_custom_call.1']
  #allocation5 [shape = 'u8[512]{0}', space=smem, size = 0x200, scoped, tag = 'prefetched SMEM operand 0']
  #allocation8 [shape = 's32[]', space=sflag, size = 0x4, offset = 0, fixed_abs, tag = 'sflag constant byte address 0x0 - dummy sync flag']
  #allocation9 [shape = 's32[]', space=sflag, size = 0x4, offset = 0, fixed_abs, tag = 'sflag constant byte address 0x0 - dummy sync flag']
  #allocation10 [shape = 'u32[]', space=smem, size = 0x4, offset = 0x44, fixed_abs, tag = 'smem constant byte address 0x44 - assertion arg 0']
  #allocation11 [shape = 'u32[]', space=smem, size = 0x4, offset = 0x48, fixed_abs, tag = 'smem constant byte address 0x48 - assertion arg 1']
  %s0 = inlined_call_operand.hbm [shape: s32[16], index: 0, kind: input, shape index: {}]
  %s1 = inlined_call_operand.vmem [shape: s32[16,1], index: 1, kind: input, shape index: {}]
  %s2 = inlined_call_operand.vmem [shape: f32[16,32], index: 2, kind: input, shape index: {}]
  %s3 = inlined_call_operand.vmem [shape: f32[2,32], index: 3, kind: input, shape index: {}]
  %s4 = inlined_call_operand.vmem [shape: f32[1,32], index: 4, kind: input, shape index: {}]
  %s5 = inlined_call_operand.vmem [shape: f32[1,32], index: 5, kind: input, shape index: {}]
  %s6 = inlined_call_operand.hbm [shape: f32[32,32], index: 6, kind: input, shape index: {}]
  %s7 = inlined_call_operand.hbm [shape: f32[16,32], index: 7, kind: output, shape index: {}]
  %s8 = sld [smem:[#allocation0]]
  $region71: #{tpu_custom_call.1} parent=0
    _
  %s10 = ssub.s32 1, %s8
  %s11 = scalar_select 0, %s10, %s8
  %s13 = sshll.u32 %s0, 4
  %s14 = int_to_ptr.hbm [resolvable:$true] %s13
  %16 = dma.hbm_to_smem %s14, 16, [#allocation5], [#allocation4]
  %18 = dma.done [#allocation4], 16
  %19 = sfence
  $region1: #{tpu_custom_call.1} parent=0
    #allocation6 [shape = 'u8[8192]{0}', space=vmem, size = 0x2000, scoped, tag = 'output window, operand 0']
    #allocation7 [shape = 's32[2]{0}', space=sflag, size = 0x8, scoped, tag = 'scoped memory for tpu_custom_call.1']
    %20 = vsyncpa [#allocation7], 0
    %s21 = scalar_lea.sflag [#allocation7], 1
    %22 = vsyncpa %s21, 0
    loop: start=0, step=1, limit=4
    $region2: #{tpu_custom_call.1} parent=1 // loop_pre_header
      _
    $region3: #{tpu_custom_call.1} parent=1 // loop_header
      %s24 = sphi 0, %s28
      %p25 = scmp.ge.s32.totalorder %s24, 4
      %s31 = sphi 0, %s43
      %s32 = sphi 0, %s39
      %s33 = sphi 0, %s31
      %s34 = sphi 0, %s32
      %s35 = sphi 0, %s33
      %s36 = sphi 0, %s34
      %s48 = sphi 0, %s50
      %s51 = sphi 0, %s48
      %s52 = sphi 0, %s51
      %s68 = sphi 0, %s52
      %s74 = sphi 0, %s76
      %s77 = sphi 0, %s74
      %s78 = sphi 0, %s77
      %s94 = sphi 0, %s78
      %s98 = sphi 0, %s98
      %s100 = sphi 0, %s98
      %s101 = sphi 0, %s100
      %s115 = sphi 0, %s101
      %s119 = sphi 0, %s119
      %s121 = sphi 0, %s119
      %s122 = sphi 0, %s121
      %s136 = sphi 0, %s122
      %s140 = sphi 0, %s140
      %s142 = sphi 0, %s140
      %s143 = sphi 0, %s142
      %s157 = sphi 0, %s143
      %s165 = sphi 0, %s167
      %s168 = sphi 0, %s165
      %s169 = sphi 0, %s168
      %s185 = sphi 0, %s169
    $region4: #{tpu_custom_call.1} parent=1 // loop_header_branch
      %27 = sbr.rel (%p25) target = $region8
    $region5: #{tpu_custom_call.1} parent=1 // loop_body
      %s29 = ssub.s32 %s24, 1
      %s30 = ssub.s32 %s24, 2
      %s37 = sadd.s32 1, %s32
      %p38 = scmp.ge.s32.totalorder %s37, 1
      %s39 = scalar_select %p38, 0, %s37
      %s40 = sadd.s32 1, %s31
      %s41 = scalar_select %p38, %s40, %s31
      %p42 = scmp.ge.s32.totalorder %s41, 2
      %s43 = scalar_select %p42, 0, %s41
      %s44 = sadd.s32 %s31, %s32
      %s45 = sadd.s32 %s43, %s39
      %s46 = ssub.s32 %s44, %s45
      %p47 = scmp.eq.s32.totalorder %s46, 0
      %s49 = sadd.s32 %s48, 1
      %s50 = scalar_select %p47, %s48, %s49
      %p53 = pneg %p47
      %p54 = scmp.eq.s32.totalorder %s24, 1
      %p55 = por %p53, %p54
      %p56 = scmp.ne.s32.totalorder %s48, %s51
      %p57 = scmp.eq.s32.totalorder %s24, 0
      %p58 = por %p56, %p57
      %p59 = scmp.ne.s32.totalorder %s48, %s51
      %p60 = scmp.eq.s32.totalorder %s29, 1
      %p61 = por %p59, %p60
      %p62 = scmp.ne.s32.totalorder %s51, %s52
      %p63 = scmp.eq.s32.totalorder %s29, 0
      %p64 = por %p62, %p63
      %p65 = scmp.ne.s32.totalorder %s51, %s52
      %p66 = scmp.eq.s32.totalorder %s30, 1
      %p67 = por %p65, %p66
      %p69 = scmp.ne.s32.totalorder %s52, %s68
      %p70 = scmp.eq.s32.totalorder %s30, 0
      %p71 = por %p69, %p70
      %s72 = ssub.s32 %s32, %s39
      %p73 = scmp.eq.s32.totalorder %s72, 0
      %s75 = sadd.s32 %s74, 1
      %s76 = scalar_select %p73, %s74, %s75
      %p79 = pneg %p73
      %p80 = scmp.eq.s32.totalorder %s24, 1
      %p81 = por %p79, %p80
      %p82 = scmp.ne.s32.totalorder %s74, %s77
      %p83 = scmp.eq.s32.totalorder %s24, 0
      %p84 = por %p82, %p83
      %p85 = scmp.ne.s32.totalorder %s74, %s77
      %p86 = scmp.eq.s32.totalorder %s29, 1
      %p87 = por %p85, %p86
      %p88 = scmp.ne.s32.totalorder %s77, %s78
      %p89 = scmp.eq.s32.totalorder %s29, 0
      %p90 = por %p88, %p89
      %p91 = scmp.ne.s32.totalorder %s77, %s78
      %p92 = scmp.eq.s32.totalorder %s30, 1
      %p93 = por %p91, %p92
      %p95 = scmp.ne.s32.totalorder %s78, %s94
      %p96 = scmp.eq.s32.totalorder %s30, 0
      %p97 = por %p95, %p96
      %s99 = sadd.s32 %s98, 1
      %p102 = scmp.eq.s32.totalorder %s24, 1
      %p103 = scmp.ne.s32.totalorder %s98, %s100
      %p104 = scmp.eq.s32.totalorder %s24, 0
      %p105 = por %p103, %p104
      %p106 = scmp.ne.s32.totalorder %s98, %s100
      %p107 = scmp.eq.s32.totalorder %s29, 1
      %p108 = por %p106, %p107
      %p109 = scmp.ne.s32.totalorder %s100, %s101
      %p110 = scmp.eq.s32.totalorder %s29, 0
      %p111 = por %p109, %p110
      %p112 = scmp.ne.s32.totalorder %s100, %s101
      %p113 = scmp.eq.s32.totalorder %s30, 1
      %p114 = por %p112, %p113
      %p116 = scmp.ne.s32.totalorder %s101, %s115
      %p117 = scmp.eq.s32.totalorder %s30, 0
      %p118 = por %p116, %p117
      %s120 = sadd.s32 %s119, 1
      %p123 = scmp.eq.s32.totalorder %s24, 1
      %p124 = scmp.ne.s32.totalorder %s119, %s121
      %p125 = scmp.eq.s32.totalorder %s24, 0
      %p126 = por %p124, %p125
      %p127 = scmp.ne.s32.totalorder %s119, %s121
      %p128 = scmp.eq.s32.totalorder %s29, 1
      %p129 = por %p127, %p128
      %p130 = scmp.ne.s32.totalorder %s121, %s122
      %p131 = scmp.eq.s32.totalorder %s29, 0
      %p132 = por %p130, %p131
      %p133 = scmp.ne.s32.totalorder %s121, %s122
      %p134 = scmp.eq.s32.totalorder %s30, 1
      %p135 = por %p133, %p134
      %p137 = scmp.ne.s32.totalorder %s122, %s136
      %p138 = scmp.eq.s32.totalorder %s30, 0
      %p139 = por %p137, %p138
      %s141 = sadd.s32 %s140, 1
      %p144 = scmp.eq.s32.totalorder %s24, 1
      %p145 = scmp.ne.s32.totalorder %s140, %s142
      %p146 = scmp.eq.s32.totalorder %s24, 0
      %p147 = por %p145, %p146
      %p148 = scmp.ne.s32.totalorder %s140, %s142
      %p149 = scmp.eq.s32.totalorder %s29, 1
      %p150 = por %p148, %p149
      %p151 = scmp.ne.s32.totalorder %s142, %s143
      %p152 = scmp.eq.s32.totalorder %s29, 0
      %p153 = por %p151, %p152
      %p154 = scmp.ne.s32.totalorder %s142, %s143
      %p155 = scmp.eq.s32.totalorder %s30, 1
      %p156 = por %p154, %p155
      %p158 = scmp.ne.s32.totalorder %s143, %s157
      %p159 = scmp.eq.s32.totalorder %s30, 0
      %p160 = por %p158, %p159
      %s161 = sadd.s32 %s31, %s32
      %s162 = sadd.s32 %s43, %s39
      %s163 = ssub.s32 %s161, %s162
      %p164 = scmp.eq.s32.totalorder %s163, 0
      %s166 = sadd.s32 %s165, 1
      %s167 = scalar_select %p164, %s165, %s166
      %p170 = pneg %p164
      %p171 = scmp.eq.s32.totalorder %s24, 1
      %p172 = por %p170, %p171
      %p173 = scmp.ne.s32.totalorder %s165, %s168
      %p174 = scmp.eq.s32.totalorder %s24, 0
      %p175 = por %p173, %p174
      %p176 = scmp.ne.s32.totalorder %s165, %s168
      %p177 = scmp.eq.s32.totalorder %s29, 1
      %p178 = por %p176, %p177
      %p179 = scmp.ne.s32.totalorder %s168, %s169
      %p180 = scmp.eq.s32.totalorder %s29, 0
      %p181 = por %p179, %p180
      %p182 = scmp.ne.s32.totalorder %s168, %s169
      %p183 = scmp.eq.s32.totalorder %s30, 1
      %p184 = por %p182, %p183
      %p186 = scmp.ne.s32.totalorder %s169, %s185
      %p187 = scmp.eq.s32.totalorder %s30, 0
      %p188 = por %p186, %p187
      %p189 = scmp.le.s32.totalorder 1, %s24
      %p190 = scmp.lt.s32.totalorder %s24, 3
      %p191 = pnand %p189, %p190
      %p192 = pneg %p191
      // Predicated region
      $region9: #{tpu_custom_call.1} parent=5 // pred_check
        _
      $region10: #{tpu_custom_call.1} parent=5 // pred_check_branch
        %194 = sbr.rel (%p191) target = $region12
      $region11: #{tpu_custom_call.1} parent=5 // pred_region
        %s195 = ssub.s32 %s24, 1
        // Predicated region
        $region13: #{tpu_custom_call.1} parent=11 // pred_check
          %p196 = pneg %p90
        $region14: #{tpu_custom_call.1} parent=11 // pred_check_branch
          %198 = sbr.rel (%p196) target = $region16
        $region15: #{tpu_custom_call.1} parent=11 // pred_region
          %p199 = scmp.lt.s32.totalorder %s34, 1
          %s200 = scalar_select %p199, %s34, 1
          %s201 = smul.addr %s200, 8
          %s202 = scalar_lea.vmem %s2, %s201
        $region16: #{tpu_custom_call.1} parent=11 // pred_fallthru
          _
        // Predicated region
        $region17: #{tpu_custom_call.1} parent=11 // pred_check
          %p203 = pneg %p111
        $region18: #{tpu_custom_call.1} parent=11 // pred_check_branch
          %205 = sbr.rel (%p203) target = $region20
        $region19: #{tpu_custom_call.1} parent=11 // pred_region
          _
        $region20: #{tpu_custom_call.1} parent=11 // pred_fallthru
          _
        // Predicated region
        $region21: #{tpu_custom_call.1} parent=11 // pred_check
          %p206 = pneg %p132
        $region22: #{tpu_custom_call.1} parent=11 // pred_check_branch
          %208 = sbr.rel (%p206) target = $region24
        $region23: #{tpu_custom_call.1} parent=11 // pred_region
          _
        $region24: #{tpu_custom_call.1} parent=11 // pred_fallthru
          _
        // Predicated region
        $region25: #{tpu_custom_call.1} parent=11 // pred_check
          %p209 = pneg %p153
        $region26: #{tpu_custom_call.1} parent=11 // pred_check_branch
          %211 = sbr.rel (%p209) target = $region28
        $region27: #{tpu_custom_call.1} parent=11 // pred_region
          _
        $region28: #{tpu_custom_call.1} parent=11 // pred_fallthru
          _
      $region12: #{tpu_custom_call.1} parent=5 // pred_fallthru
        _
      %p212 = scmp.lt.s32.totalorder %s24, 2
      // Predicated region
      $region29: #{tpu_custom_call.1} parent=5 // pred_check
        %p213 = pneg %p212
      $region30: #{tpu_custom_call.1} parent=5 // pred_check_branch
        %215 = sbr.rel (%p213) target = $region32
      $region31: #{tpu_custom_call.1} parent=5 // pred_region
        // Predicated region
        $region33: #{tpu_custom_call.1} parent=31 // pred_check
          %p216 = pneg %p58
        $region34: #{tpu_custom_call.1} parent=31 // pred_check_branch
          %218 = sbr.rel (%p216) target = $region36
        $region35: #{tpu_custom_call.1} parent=31 // pred_region
          %s219 = sadd.s32 %s31, %s32
          %p220 = scmp.lt.s32.totalorder %s219, 1
          %s221 = scalar_select %p220, %s219, 1
          %s222 = smul.addr %s221, 8
          %s223 = scalar_lea.vmem %s1, %s222
          %s224 = sadd.s32 %s31, %s32
        $region36: #{tpu_custom_call.1} parent=31 // pred_fallthru
          _
      $region32: #{tpu_custom_call.1} parent=5 // pred_fallthru
        _
      %p225 = scmp.le.s32.totalorder 1, %s24
      %p226 = scmp.lt.s32.totalorder %s24, 3
      %p227 = pnand %p225, %p226
      %p228 = pneg %p227
      // Predicated region
      $region37: #{tpu_custom_call.1} parent=5 // pred_check
        _
      $region38: #{tpu_custom_call.1} parent=5 // pred_check_branch
        %230 = sbr.rel (%p227) target = $region40
      $region39: #{tpu_custom_call.1} parent=5 // pred_region
        %s231 = ssub.s32 %s24, 1
        %s232 = sadd.s32 %s33, %s34
        %p233 = scmp.lt.s32.totalorder %s232, 1
        %s234 = scalar_select %p233, %s232, 1
        %s235 = smul.addr %s234, 8
        %s236 = scalar_lea.vmem %s1, %s235
        %p237 = pneg %p64
        %p238 = pneg %p61
        %p239 = scmp.lt.s32.totalorder %s34, 1
        %s240 = scalar_select %p239, %s34, 1
        %s241 = smul.addr %s240, 8
        %s242 = scalar_lea.vmem %s2, %s241
        %p243 = pneg %p90
        %p244 = pneg %p87
        %p245 = pneg %p111
        %p246 = pneg %p108
        %p247 = pneg %p132
        %p248 = pneg %p129
        %p249 = pneg %p153
        %p250 = pneg %p150
        %p251 = pneg %p181
        %p252 = pneg %p178
        %s253 = sand.u32 %s168, 1
        %s254 = scalar_lea.sflag [#allocation7], %s253
        %s255 = sand.u32 %s168, 1
        %s256 = smul.addr %s255, 8
        %s257 = scalar_lea.vmem [#allocation6], %s256
        %s258 = sadd.s32 %s33, %s34
        %p259 = scmp.lt.s32.totalorder %s258, 1
        %s260 = scalar_select %p259, %s258, 1
        %s261 = smul.addr %s260, 8
        %s262 = scalar_lea.vmem %s1, %s261
        %s263 = sadd.s32 %s33, %s34
        %p264 = scmp.lt.s32.totalorder %s34, 1
        %s265 = scalar_select %p264, %s34, 1
        %s266 = smul.addr %s265, 8
        %s267 = scalar_lea.vmem %s2, %s266
        %s268 = sadd.s32 %s33, %s34
        %s269 = sadd.s32 %s33, %s34
        %s270 = smul.u32 %s269, 8
        loop: start=0, step=1, limit=8
        $region41: #{tpu_custom_call.1} parent=39 // loop_pre_header
          _
        $region42: #{tpu_custom_call.1} parent=39 // loop_header
          %s272 = sphi 0, %s276
          %p273 = scmp.ge.s32.totalorder %s272, 8
        $region43: #{tpu_custom_call.1} parent=39 // loop_header_branch
          %275 = sbr.rel (%p273) target = $region47
        $region44: #{tpu_custom_call.1} parent=39 // loop_body
          %s277 = sadd.s32 %s270, %s272
          %s278 = sld [smem:[#allocation5 + %s277]]
          %s279 = scalar_lea.hbm %s6, %s278
          %s280 = scalar_lea.vmem [#allocation2], %s272
          // Predicated region
          $region48: #{tpu_custom_call.1} parent=44 // pred_check
            _
          $region49: #{tpu_custom_call.1} parent=44 // pred_check_branch
            %282 = sbr.rel target = $region51
          $region50: #{tpu_custom_call.1} parent=44 // pred_region
            %283 = sst [smem:[#allocation10]] [#allocation9]
            %284 = sst [smem:[#allocation11]] [#allocation8]
          $region51: #{tpu_custom_call.1} parent=44 // pred_fallthru
            _
          %286 = shalt.err (0)
          %s288 = sshll.u32 %s279, 4
          %s289 = int_to_ptr.hbm [resolvable:$true] %s288
          %s290 = sshll.u32 %s280, 4
          %s291 = int_to_ptr.vmem [resolvable:$true] %s290
          %293 = dma.hbm_to_vmem [thread:$0]  %s289, 16, %s291, [#allocation3]
        $region45: #{tpu_custom_call.1} parent=39 // loop_footer
          %s276 = sadd.s32 1, %s272
        $region46: #{tpu_custom_call.1} parent=39 // loop_footer_branch
          %271 = sbr.rel target = $region42
        $region47: #{tpu_custom_call.1} parent=39 // loop_exit
          _
        %v294 = vld [vmem:[%s262] sm:$0xff]
        %v295 = vld [vmem:[%s267] sm:$0xff]
        %vm296 = vcmp.eq.s32.totalorder %v294, 0
        %v297 = vld [vmem:[%s3] sm:$0x1]
        %v298 = vsel %vm296, 1, 0
        %299 = vset.pattern.permute.xlu0 0
        %300 = vperm.xlu0 %299, %v298
        %v301 = vpop.permute.xlu0 %300
        %vm302 = vcmp.eq.s32.totalorder %v301, 1
        %v303 = vperm.slane %v297, 0
        %v304 = vsel %vm302, %v303, 0.0
        %v305 = vadd.f32 %v295, %v304
        %vm306 = vcmp.eq.s32.totalorder %v294, 1
        %v307 = vld [vmem:[%s3 + $0x1] sm:$0x1]
        %v308 = vsel %vm306, 1, 0
        %309 = vset.pattern.permute.xlu0 0
        %310 = vperm.xlu0 %309, %v308
        %v311 = vpop.permute.xlu0 %310
        %vm312 = vcmp.eq.s32.totalorder %v311, 1
        %v313 = vperm.slane %v307, 0
        %v314 = vsel %vm312, %v313, 0.0
        %v315 = vadd.f32 %v305, %v314
        loop: start=0, step=1, limit=8
        $region52: #{tpu_custom_call.1} parent=39 // loop_pre_header
          _
        $region53: #{tpu_custom_call.1} parent=39 // loop_header
          %s317 = sphi 0, %s321
          %p318 = scmp.ge.s32.totalorder %s317, 8
        $region54: #{tpu_custom_call.1} parent=39 // loop_header_branch
          %320 = sbr.rel (%p318) target = $region58
        $region55: #{tpu_custom_call.1} parent=39 // loop_body
          %s322 = smul.u32 1, 1
          %s323 = sshll.u32 %s322, 4
          %324 = dma.done [#allocation3], %s323
        $region56: #{tpu_custom_call.1} parent=39 // loop_footer
          %s321 = sadd.s32 1, %s317
        $region57: #{tpu_custom_call.1} parent=39 // loop_footer_branch
          %316 = sbr.rel target = $region53
        $region58: #{tpu_custom_call.1} parent=39 // loop_exit
          _
        %v325 = vld [vmem:[#allocation2] sm:$0xff]
        %v326 = vadd.f32 %v325, %v315
        %vm327 = vcmask 261120
        %v328 = vsel %vm327, %v326, 0.0
        %329 = vadd.xlane.f32.xlu0 %v328
        %v330 = vpop.xlane.xlu0 %329
        %v331 = vrcp.pop 32.0
        %v332 = vmul.f32 32.0, %v331
        %v333 = vsub.f32 1.0, %v332
        %v334 = vmul.f32 %v331, %v333
        %v335 = vadd.f32 %v331, %v334
        %vm336 = vweird.f32 %v331
        %v337 = vsel %vm336, %v331, %v335
        %v338 = vmul.f32 %v330, %v337
        %v339 = vmul.f32 %v326, %v326
        %v340 = vsel %vm327, %v339, 0.0
        %341 = vadd.xlane.f32.xlu0 %v340
        %v342 = vpop.xlane.xlu0 %341
        %v343 = vmul.f32 %v342, %v337
        %v344 = vmul.f32 %v338, %v338
        %v345 = vsub.f32 %v343, %v344
        %v346 = vadd.f32 %v345, 1e-05
        %v347 = vrsqrt.pop %v346
        %v348 = vmul.f32 %v347, %v346
        %v349 = vmul.f32 %v348, %v347
        %v350 = vmul.f32 0.5, %v349
        %v351 = vsub.f32 1.5, %v350
        %v352 = vmul.f32 %v347, %v351
        %vm353 = vweird.f32 %v346
        %vm354 = vweird.f32 %v347
        %vm355 = vmor %vm353, %vm354
        %v356 = vsel %vm355, %v347, %v352
        %v357 = vsub.f32 %v326, %v338
        %v358 = vmul.f32 %v357, %v356
        %v359 = vld [vmem:[%s4] sm:$0x1]
        %v361 = vperm.slane %v359, 0
        %v363 = vmul.f32 %v358, %v361
        %v364 = vld [vmem:[%s5] sm:$0x1]
        %v366 = vperm.slane %v364, 0
        %v368 = vadd.f32 %v363, %v366
        %369 = vst.msk [vmem:[%s257] sm:$0xff] %vm327, %v368
        %s370 = sand.u32 %s168, 1
        %s371 = scalar_lea.sflag [#allocation7], %s370
        %s372 = sand.u32 %s168, 1
        %s373 = smul.addr %s372, 8
        %s374 = scalar_lea.vmem [#allocation6], %s373
        // Predicated region
        $region59: #{tpu_custom_call.1} parent=39 // pred_check
          %p375 = pneg %p178
        $region60: #{tpu_custom_call.1} parent=39 // pred_check_branch
          %377 = sbr.rel (%p375) target = $region62
        $region61: #{tpu_custom_call.1} parent=39 // pred_region
          %s378 = sadd.s32 %s33, %s34
          %380 = vsyncadd %s371, 0
          %s381 = smul.addr %s378, 8
          %s382 = scalar_lea.hbm %s7, %s381
          %s384 = sshll.u32 %s374, 4
          %s385 = int_to_ptr.vmem [resolvable:$true] %s384
          %s386 = sshll.u32 %s382, 4
          %s387 = int_to_ptr.hbm [resolvable:$true] %s386
          %389 = dma.vmem_to_hbm [thread:$0]  %s385, 128, %s387, %s371
        $region62: #{tpu_custom_call.1} parent=39 // pred_fallthru
          _
      $region40: #{tpu_custom_call.1} parent=5 // pred_fallthru
        _
      %p390 = scmp.le.s32.totalorder 2, %s24
      // Predicated region
      $region63: #{tpu_custom_call.1} parent=5 // pred_check
        %p391 = pneg %p390
      $region64: #{tpu_custom_call.1} parent=5 // pred_check_branch
        %393 = sbr.rel (%p391) target = $region66
      $region65: #{tpu_custom_call.1} parent=5 // pred_region
        %s394 = ssub.s32 %s24, 2
        // Predicated region
        $region67: #{tpu_custom_call.1} parent=65 // pred_check
          %p395 = pneg %p184
        $region68: #{tpu_custom_call.1} parent=65 // pred_check_branch
          %397 = sbr.rel (%p395) target = $region70
        $region69: #{tpu_custom_call.1} parent=65 // pred_region
          %s398 = sand.u32 %s169, 1
          %s399 = scalar_lea.sflag [#allocation7], %s398
          %s400 = sand.u32 %s169, 1
          %s401 = smul.addr %s400, 8
          %s402 = scalar_lea.vmem [#allocation6], %s401
          %404 = dma.done %s399, 128
        $region70: #{tpu_custom_call.1} parent=65 // pred_fallthru
          _
      $region66: #{tpu_custom_call.1} parent=5 // pred_fallthru
        _
    $region6: #{tpu_custom_call.1} parent=1 // loop_footer
      %s28 = sadd.s32 1, %s24
    $region7: #{tpu_custom_call.1} parent=1 // loop_footer_branch
      %23 = sbr.rel target = $region3
    $region8: #{tpu_custom_call.1} parent=1 // loop_exit
      _
    %405 = vsyncpa [#allocation7], 1
    %s406 = scalar_lea.sflag [#allocation7], 1
    %407 = vsyncpa %s406, 1
  %408 = vsyncmov [#allocation3]
  %s409 = vpop.sfrf %408
  %p410 = scmp.eq.s32.totalorder %s409, 0
  %p411 = pneg %p410
  %413 = shalt.err (%p411)

</llo_original>
